<compile_context>
chip_gen: v7x
topology: tpu7x:2x2x1
jax: 0.10.0
libtpu: 0.0.40
codegen_flags: <defaults>
</compile_context>

<pallas_src>
import functools

import jax
import jax.numpy as jnp
from jax import lax
from jax.experimental import pallas as pl
from jax.experimental.pallas import tpu as pltpu

_NEG_PAD = -1e30  # bias for padded vocab columns: exp(-1e30 - m) underflows to exactly 0 in f32


def _round_up(x, m):
    return ((x + m - 1) // m) * m


def _decoder_kernel(emb_ref, hid_ref, enc_ref,
                    wih_t_ref, whh_t_ref, brnn_ref,
                    wout_t_ref, bout_ref,
                    logits_ref, lse_ref, hidout_ref,
                    h_bf16_sc, m_sc, l_sc,
                    *, use_attention: bool):
    j = pl.program_id(0)

    # ---- one-time work (attention + RNN cell), only at the first vocab tile ----------
    @pl.when(j == 0)
    def _():
        emb = emb_ref[...]                                   # (N, E)
        hid = hid_ref[...]                                   # (N, H)  == hidden.squeeze(0)
        if use_attention:
            enc = enc_ref[...]                               # (N, T, H)
            scores = jnp.sum(enc * hid[:, None, :], axis=2)              # (N, T)
            hid_sq = jnp.sum(hid * hid, axis=1, keepdims=True)           # (N, 1)
            enc_sq = jnp.sum(enc * enc, axis=2)                          # (N, T)
            cos = scores * lax.rsqrt(hid_sq * enc_sq)                    # cosine sim (EUP rsqrt)
            cos = cos - jnp.max(cos, axis=1, keepdims=True)              # softmax over T
            e = jnp.exp(cos)
            attn = e / jnp.sum(e, axis=1, keepdims=True)                 # (N, T)
            hid = jnp.sum(attn[:, :, None] * enc, axis=1)                # context replaces hidden

        # single-step RNN cell: h' = tanh(x @ W_ih^T + h @ W_hh^T + (b_ih + b_hh))
        h_new = jnp.tanh(
            jnp.dot(emb, wih_t_ref[...], preferred_element_type=jnp.float32)
            + jnp.dot(hid, whh_t_ref[...], preferred_element_type=jnp.float32)
            + brnn_ref[...])                                             # (N, H)
        hidout_ref[...] = h_new
        h_bf16_sc[...] = h_new.astype(jnp.bfloat16)
        m_sc[...] = jnp.full(m_sc.shape, -jnp.inf, dtype=m_sc.dtype)
        l_sc[...] = jnp.zeros(l_sc.shape, dtype=l_sc.dtype)

    # ---- per vocab tile: bf16 matmul (f32 acc) + flash-style log-softmax statistics ---
    logits = jnp.dot(h_bf16_sc[...], wout_t_ref[...],
                     preferred_element_type=jnp.float32) + bout_ref[...]   # (N, TV)
    logits_ref[...] = logits                                               # raw logits out

    m_prev = m_sc[...]
    m_new = jnp.maximum(m_prev, jnp.max(logits, axis=1, keepdims=True))
    l_sc[...] = (l_sc[...] * jnp.exp(m_prev - m_new)
                 + jnp.sum(jnp.exp(logits - m_new), axis=1, keepdims=True))
    m_sc[...] = m_new

    @pl.when(j == pl.num_programs(0) - 1)
    def _():
        lse_ref[...] = m_sc[...] + jnp.log(l_sc[...])


def init_params(key, emb_size, encoder_hidden_size, decoder_hidden_size, output_size):
    """PyTorch-layout parameters (same shapes/roles as the nn.Module)."""
    assert encoder_hidden_size == decoder_hidden_size, "attention context feeds RNN hidden"
    ks = jax.random.split(key, 7)
    s = 0.1
    return {
        "embedding": s * jax.random.normal(ks[0], (output_size, emb_size), jnp.float32),
        "W_ih": s * jax.random.normal(ks[1], (decoder_hidden_size, emb_size), jnp.float32),
        "W_hh": s * jax.random.normal(ks[2], (decoder_hidden_size, decoder_hidden_size), jnp.float32),
        "b_ih": s * jax.random.normal(ks[3], (decoder_hidden_size,), jnp.float32),
        "b_hh": s * jax.random.normal(ks[4], (decoder_hidden_size,), jnp.float32),
        "W_out": s * jax.random.normal(ks[5], (output_size, decoder_hidden_size), jnp.float32),
        "b_out": s * jax.random.normal(ks[6], (output_size,), jnp.float32),
    }


def prepare_params(params, *, block_v=1024):
    """One-time weight prep (call OUTSIDE the decode loop): transpose, pad, fold biases,
    pre-cast W_out to bf16."""
    V, E = params["embedding"].shape
    H = params["W_hh"].shape[0]

    E_pad = _round_up(E, 128)
    H_pad = _round_up(H, 128)
    TV = _round_up(min(block_v, V), 128)       # vocab tile width (lane-dense, multiple of 128)
    V_pad = _round_up(V, TV)

    f32 = jnp.float32
    emb_tab = jnp.pad(params["embedding"].astype(f32), ((0, 0), (0, E_pad - E)))
    w_ih_t = jnp.pad(params["W_ih"].astype(f32).T, ((0, E_pad - E), (0, H_pad - H)))
    w_hh_t = jnp.pad(params["W_hh"].astype(f32).T, ((0, H_pad - H), (0, H_pad - H)))
    b_rnn = jnp.pad((params["b_ih"] + params["b_hh"]).astype(f32), (0, H_pad - H))[None, :]
    w_out_t = jnp.pad(params["W_out"].astype(f32).T,
                      ((0, H_pad - H), (0, V_pad - V))).astype(jnp.bfloat16)
    b_out = jnp.pad(params["b_out"].astype(f32), (0, V_pad - V),
                    constant_values=_NEG_PAD)[None, :]

    return {
        "embedding": emb_tab,        # (V, E_pad) f32
        "W_ih_T": w_ih_t,            # (E_pad, H_pad) f32
        "W_hh_T": w_hh_t,            # (H_pad, H_pad) f32
        "b_rnn": b_rnn,              # (1, H_pad) f32  == b_ih + b_hh
        "W_out_T": w_out_t,          # (H_pad, V_pad) bf16
        "b_out": b_out,              # (1, V_pad) f32 (-1e30 padding)
        "E": E, "H": H, "V": V,
        "E_pad": E_pad, "H_pad": H_pad, "V_pad": V_pad, "TV": TV,
    }


def decoder_forward(input_ids, hidden, encoder_outputs, prepared, *, attention=True):
    """Pallas-backed forward pass mirroring Decoder.forward (model_type='RNN', eval mode).

    Args:
      input_ids:       (N, 1) int32 token indices.
      hidden:          (1, N, H) float32 previous decoder hidden state.
      encoder_outputs: (N, T, H) float32.
      prepared:        dict from prepare_params().
      attention:       static bool flag (same semantics as the PyTorch arg).
    Returns:
      (output, hidden_out) with shapes (N, output_size) and (1, N, H).
    """
    H, V = prepared["H"], prepared["V"]
    E_pad, H_pad, V_pad, TV = prepared["E_pad"], prepared["H_pad"], prepared["V_pad"], prepared["TV"]

    N = input_ids.shape[0]
    T = encoder_outputs.shape[1]
    N_pad = _round_up(max(N, 1), 8)

    # Glue: embedding gather (dropout in eval mode == identity), squeeze seq dim of length 1.
    emb = prepared["embedding"][input_ids[:, 0]]                     # (N, E_pad)
    emb = jnp.pad(emb, ((0, N_pad - N), (0, 0)))

    hid = jnp.pad(hidden[0].astype(jnp.float32), ((0, 0), (0, H_pad - H)))
    hid = jnp.pad(hid, ((0, N_pad - N), (0, 0)), constant_values=1.0)   # nonzero rows -> finite norms

    enc = jnp.pad(encoder_outputs.astype(jnp.float32), ((0, 0), (0, 0), (0, H_pad - H)))
    enc = jnp.pad(enc, ((0, N_pad - N), (0, 0), (0, 0)), constant_values=1.0)

    n_tiles = V_pad // TV
    kernel = functools.partial(_decoder_kernel, use_attention=attention)

    raw_logits, lse, h_new = pl.pallas_call(
        kernel,
        out_shape=(
            jax.ShapeDtypeStruct((N_pad, V_pad), jnp.float32),   # raw logits
            jax.ShapeDtypeStruct((N_pad, 1), jnp.float32),       # log-sum-exp
            jax.ShapeDtypeStruct((N_pad, H_pad), jnp.float32),   # new hidden state
        ),
        grid_spec=pltpu.PrefetchScalarGridSpec(
            num_scalar_prefetch=0,
            grid=(n_tiles,),
            in_specs=[
                pl.BlockSpec((N_pad, E_pad), lambda j: (0, 0)),        # embedded
                pl.BlockSpec((N_pad, H_pad), lambda j: (0, 0)),        # prev hidden
                pl.BlockSpec((N_pad, T, H_pad), lambda j: (0, 0, 0)),  # encoder outputs
                pl.BlockSpec((E_pad, H_pad), lambda j: (0, 0)),        # W_ih^T
                pl.BlockSpec((H_pad, H_pad), lambda j: (0, 0)),        # W_hh^T
                pl.BlockSpec((1, H_pad), lambda j: (0, 0)),            # b_ih + b_hh
                pl.BlockSpec((H_pad, TV), lambda j: (0, j)),           # W_out^T tile (streamed)
                pl.BlockSpec((1, TV), lambda j: (0, j)),               # b_out tile
            ],
            out_specs=(
                pl.BlockSpec((N_pad, TV), lambda j: (0, j)),           # raw logits tile
                pl.BlockSpec((N_pad, 1), lambda j: (0, 0)),            # lse (written at last tile)
                pl.BlockSpec((N_pad, H_pad), lambda j: (0, 0)),        # new hidden (written at j==0)
            ),
            scratch_shapes=[
                pltpu.VMEM((N_pad, H_pad), jnp.bfloat16),   # cached h_new for the vocab matmul
                pltpu.VMEM((N_pad, 1), jnp.float32),        # running max
                pltpu.VMEM((N_pad, 1), jnp.float32),        # running sum
            ],
        ),
        compiler_params=pltpu.CompilerParams(
            dimension_semantics=("arbitrary",)),   # lse accumulates across vocab tiles
    )(emb, hid, enc,
      prepared["W_ih_T"], prepared["W_hh_T"], prepared["b_rnn"],
      prepared["W_out_T"], prepared["b_out"])

    logp = raw_logits[:N, :V] - lse[:N]          # cheap normalization pass in the wrapper
    return logp, h_new[:N, :H][None, :, :]


def _reference_forward(input_ids, hidden, encoder_outputs, params, attention=True,
                       bf16_output_proj=True):
    """Pure-JAX mirror of the PyTorch forward, for correctness checking."""
    embedded = params["embedding"][input_ids[:, 0]]
    hid = hidden[0]
    if attention:
        enc = encoder_outputs
        scores = jnp.einsum("nh,nth->nt", hid, enc)
        hid_norm = jnp.linalg.norm(hid, axis=1, keepdims=True)
        enc_norm = jnp.linalg.norm(enc, axis=2)
        attn = jax.nn.softmax(scores / (hid_norm * enc_norm), axis=1)
        hid = jnp.einsum("nt,nth->nh", attn, enc)
    h_new = jnp.tanh(embedded @ params["W_ih"].T + params["b_ih"]
                     + hid @ params["W_hh"].T + params["b_hh"])
    w_out_t = params["W_out"].T
    if bf16_output_proj:
        logits = (h_new.astype(jnp.bfloat16).astype(jnp.float32)
                  @ w_out_t.astype(jnp.bfloat16).astype(jnp.float32)
                  + params["b_out"])
    else:
        logits = h_new @ w_out_t + params["b_out"]
    logp = jax.nn.log_softmax(logits, axis=1)
    return logp, h_new[None]


if __name__ == "__main__":
    # Small shapes consistent with the module's forward.
    N, T = 2, 8
    emb_size = 16
    enc_hidden = dec_hidden = 32
    output_size = 40

    key = jax.random.PRNGKey(0)
    k_par, k_in, k_hid, k_enc = jax.random.split(key, 4)

    params = init_params(k_par, emb_size, enc_hidden, dec_hidden, output_size)
    prepared = prepare_params(params, block_v=1024)

    input_ids = jax.random.randint(k_in, (N, 1), 0, output_size, dtype=jnp.int32)
    hidden = jax.random.normal(k_hid, (1, N, dec_hidden), jnp.float32)
    encoder_outputs = jax.random.normal(k_enc, (N, T, enc_hidden), jnp.float32)

    for attn_flag in (True, False):
        out, hid_out = decoder_forward(input_ids, hidden, encoder_outputs, prepared,
                                       attention=attn_flag)
        out = jax.block_until_ready(out)
        hid_out = jax.block_until_ready(hid_out)
        assert out.shape == (N, output_size) and hid_out.shape == (1, N, dec_hidden)

        # Tight check vs. a reference that mirrors the kernel's bf16 output projection.
        ref_out, ref_hid = _reference_forward(input_ids, hidden, encoder_outputs, params,
                                              attention=attn_flag, bf16_output_proj=True)
        assert jnp.allclose(hid_out, ref_hid, atol=1e-4, rtol=1e-4), "hidden mismatch"
        assert jnp.allclose(out, ref_out, atol=1e-2, rtol=1e-2), "log-prob mismatch (bf16 ref)"

        # Loose check vs. the pure-f32 reference (only bf16 projection noise expected).
        ref32_out, _ = _reference_forward(input_ids, hidden, encoder_outputs, params,
                                          attention=attn_flag, bf16_output_proj=False)
        assert jnp.allclose(out, ref32_out, atol=5e-2, rtol=5e-2), "log-prob mismatch (f32 ref)"

    print("KERNEL_OK")
</pallas_src>

<mosaic_0001>
module attributes {stable_mosaic.version = 11 : i64} {
  func.func @_decoder_kernel(%arg0: i32, %arg1: memref<8x128xf32, #tpu.memory_space<vmem>>, %arg2: memref<8x128xf32, #tpu.memory_space<vmem>>, %arg3: memref<8x8x128xf32, #tpu.memory_space<vmem>>, %arg4: memref<128x128xf32, #tpu.memory_space<vmem>>, %arg5: memref<128x128xf32, #tpu.memory_space<vmem>>, %arg6: memref<1x128xf32, #tpu.memory_space<vmem>>, %arg7: memref<128x128xbf16, #tpu.memory_space<vmem>>, %arg8: memref<1x128xf32, #tpu.memory_space<vmem>>, %arg9: memref<8x128xf32, #tpu.memory_space<vmem>>, %arg10: memref<8x1xf32, #tpu.memory_space<vmem>>, %arg11: memref<8x128xf32, #tpu.memory_space<vmem>>, %arg12: memref<8x128xbf16, #tpu.memory_space<vmem>>, %arg13: memref<8x1xf32, #tpu.memory_space<vmem>>, %arg14: memref<8x1xf32, #tpu.memory_space<vmem>>) attributes {dimension_semantics = [#tpu.dimension_semantics<arbitrary>], iteration_bounds = array<i64: 1>, scalar_prefetch = 0 : i64, scratch_operands = 3 : i64, tpu.core_type = #tpu.core_type<tc>, window_params = [{pipeline_mode = #tpu.pipeline_mode<synchronous>, transform_indices = @transform_0, window_bounds = array<i64: 8, 128>}, {pipeline_mode = #tpu.pipeline_mode<synchronous>, transform_indices = @transform_1, window_bounds = array<i64: 8, 128>}, {pipeline_mode = #tpu.pipeline_mode<synchronous>, transform_indices = @transform_2, window_bounds = array<i64: 8, 8, 128>}, {pipeline_mode = #tpu.pipeline_mode<synchronous>, transform_indices = @transform_3, window_bounds = array<i64: 128, 128>}, {pipeline_mode = #tpu.pipeline_mode<synchronous>, transform_indices = @transform_4, window_bounds = array<i64: 128, 128>}, {pipeline_mode = #tpu.pipeline_mode<synchronous>, transform_indices = @transform_5, window_bounds = array<i64: 1, 128>}, {transform_indices = @transform_6, window_bounds = array<i64: 128, 128>}, {transform_indices = @transform_7, window_bounds = array<i64: 1, 128>}, {transform_indices = @transform_8, window_bounds = array<i64: 8, 128>}, {pipeline_mode = #tpu.pipeline_mode<synchronous>, transform_indices = @transform_9, window_bounds = array<i64: 8, 1>}, {pipeline_mode = #tpu.pipeline_mode<synchronous>, transform_indices = @transform_10, window_bounds = array<i64: 8, 128>}]} {
    %c0_i32 = arith.constant 0 : i32
    %0 = arith.cmpi eq, %arg0, %c0_i32 : i32
    %1 = arith.extui %0 : i1 to i32
    %c0_i32_0 = arith.constant 0 : i32
    %2 = arith.cmpi ne, %1, %c0_i32_0 : i32
    scf.if %2 {
      %c0_20 = arith.constant 0 : index
      %c0_21 = arith.constant 0 : index
      %29 = vector.load %arg1[%c0_20, %c0_21] : memref<8x128xf32, #tpu.memory_space<vmem>>, vector<8x128xf32>
      %c0_22 = arith.constant 0 : index
      %c0_23 = arith.constant 0 : index
      %30 = vector.load %arg2[%c0_22, %c0_23] : memref<8x128xf32, #tpu.memory_space<vmem>>, vector<8x128xf32>
      %c0_24 = arith.constant 0 : index
      %c0_25 = arith.constant 0 : index
      %c0_26 = arith.constant 0 : index
      %31 = vector.load %arg3[%c0_24, %c0_25, %c0_26] : memref<8x8x128xf32, #tpu.memory_space<vmem>>, vector<8x8x128xf32>
      %32 = vector.shape_cast %30 : vector<8x128xf32> to vector<8x1x128xf32>
      %33 = vector.broadcast %32 : vector<8x1x128xf32> to vector<8x8x128xf32>
      %34 = arith.mulf %31, %33 : vector<8x8x128xf32>
      %cst_27 = arith.constant dense<0.000000e+00> : vector<8x8xf32>
      %35 = vector.multi_reduction <add>, %34, %cst_27 [2] : vector<8x8x128xf32> to vector<8x8xf32>
      %36 = arith.mulf %30, %30 : vector<8x128xf32>
      %cst_28 = arith.constant dense<0.000000e+00> : vector<8xf32>
      %37 = vector.multi_reduction <add>, %36, %cst_28 [1] : vector<8x128xf32> to vector<8xf32>
      %38 = vector.shape_cast %37 : vector<8xf32> to vector<8x1xf32>
      %39 = arith.mulf %31, %31 : vector<8x8x128xf32>
      %cst_29 = arith.constant dense<0.000000e+00> : vector<8x8xf32>
      %40 = vector.multi_reduction <add>, %39, %cst_29 [2] : vector<8x8x128xf32> to vector<8x8xf32>
      %41 = vector.broadcast %38 : vector<8x1xf32> to vector<8x8xf32>
      %42 = arith.mulf %41, %40 : vector<8x8xf32>
      %43 = math.rsqrt %42 : vector<8x8xf32>
      %44 = arith.mulf %35, %43 : vector<8x8xf32>
      %cst_30 = arith.constant dense<0xFF800000> : vector<8xf32>
      %45 = vector.multi_reduction <maximumf>, %44, %cst_30 [1] : vector<8x8xf32> to vector<8xf32>
      %46 = vector.shape_cast %45 : vector<8xf32> to vector<8x1xf32>
      %47 = vector.broadcast %46 : vector<8x1xf32> to vector<8x8xf32>
      %48 = arith.subf %44, %47 : vector<8x8xf32>
      %49 = math.exp %48 : vector<8x8xf32>
      %cst_31 = arith.constant dense<0.000000e+00> : vector<8xf32>
      %50 = vector.multi_reduction <add>, %49, %cst_31 [1] : vector<8x8xf32> to vector<8xf32>
      %51 = vector.shape_cast %50 : vector<8xf32> to vector<8x1xf32>
      %52 = vector.broadcast %51 : vector<8x1xf32> to vector<8x8xf32>
      %53 = arith.divf %49, %52 : vector<8x8xf32>
      %54 = vector.shape_cast %53 : vector<8x8xf32> to vector<8x8x1xf32>
      %55 = vector.broadcast %54 : vector<8x8x1xf32> to vector<8x8x128xf32>
      %56 = arith.mulf %55, %31 : vector<8x8x128xf32>
      %cst_32 = arith.constant dense<0.000000e+00> : vector<8x128xf32>
      %57 = vector.multi_reduction <add>, %56, %cst_32 [1] : vector<8x8x128xf32> to vector<8x128xf32>
      %c0_33 = arith.constant 0 : index
      %c0_34 = arith.constant 0 : index
      %58 = vector.load %arg4[%c0_33, %c0_34] : memref<128x128xf32, #tpu.memory_space<vmem>>, vector<128x128xf32>
      %cst_35 = arith.constant dense<0.000000e+00> : vector<8x128xf32>
      %59 = tpu.matmul %29, %58, %cst_35 {dimension_numbers = #tpu.dot_dimension_numbers<[1], [0], [0], [1], [0, 0, 1, 1], [], []>} : vector<8x128xf32>, vector<128x128xf32>, vector<8x128xf32> -> vector<8x128xf32>
      %c0_36 = arith.constant 0 : index
      %c0_37 = arith.constant 0 : index
      %60 = vector.load %arg5[%c0_36, %c0_37] : memref<128x128xf32, #tpu.memory_space<vmem>>, vector<128x128xf32>
      %cst_38 = arith.constant dense<0.000000e+00> : vector<8x128xf32>
      %61 = tpu.matmul %57, %60, %cst_38 {dimension_numbers = #tpu.dot_dimension_numbers<[1], [0], [0], [1], [0, 0, 1, 1], [], []>} : vector<8x128xf32>, vector<128x128xf32>, vector<8x128xf32> -> vector<8x128xf32>
      %62 = arith.addf %59, %61 : vector<8x128xf32>
      %c0_39 = arith.constant 0 : index
      %c0_40 = arith.constant 0 : index
      %63 = vector.load %arg6[%c0_39, %c0_40] : memref<1x128xf32, #tpu.memory_space<vmem>>, vector<1x128xf32>
      %64 = vector.broadcast %63 : vector<1x128xf32> to vector<8x128xf32>
      %65 = arith.addf %62, %64 : vector<8x128xf32>
      %66 = math.tanh %65 : vector<8x128xf32>
      %c0_41 = arith.constant 0 : index
      %c0_42 = arith.constant 0 : index
      %67 = vector.load %arg11[%c0_41, %c0_42] : memref<8x128xf32, #tpu.memory_space<vmem>>, vector<8x128xf32>
      tpu.vector_store %arg11[%c0_41, %c0_42], %66 {strides = array<i32>} : memref<8x128xf32, #tpu.memory_space<vmem>>, vector<8x128xf32>,
      %68 = arith.truncf %66 : vector<8x128xf32> to vector<8x128xbf16>
      %c0_43 = arith.constant 0 : index
      %c0_44 = arith.constant 0 : index
      %69 = vector.load %arg12[%c0_43, %c0_44] : memref<8x128xbf16, #tpu.memory_space<vmem>>, vector<8x128xbf16>
      tpu.vector_store %arg12[%c0_43, %c0_44], %68 {strides = array<i32>} : memref<8x128xbf16, #tpu.memory_space<vmem>>, vector<8x128xbf16>,
      %cst_45 = arith.constant 0xFF800000 : f32
      %70 = vector.broadcast %cst_45 : f32 to vector<8x1xf32>
      %c0_46 = arith.constant 0 : index
      %c0_47 = arith.constant 0 : index
      %71 = vector.load %arg13[%c0_46, %c0_47] : memref<8x1xf32, #tpu.memory_space<vmem>>, vector<8x1xf32>
      tpu.vector_store %arg13[%c0_46, %c0_47], %70 {strides = array<i32>} : memref<8x1xf32, #tpu.memory_space<vmem>>, vector<8x1xf32>,
      %cst_48 = arith.constant 0.000000e+00 : f32
      %72 = vector.broadcast %cst_48 : f32 to vector<8x1xf32>
      %c0_49 = arith.constant 0 : index
      %c0_50 = arith.constant 0 : index
      %73 = vector.load %arg14[%c0_49, %c0_50] : memref<8x1xf32, #tpu.memory_space<vmem>>, vector<8x1xf32>
      tpu.vector_store %arg14[%c0_49, %c0_50], %72 {strides = array<i32>} : memref<8x1xf32, #tpu.memory_space<vmem>>, vector<8x1xf32>,
    } else {
    }
    %c0 = arith.constant 0 : index
    %c0_1 = arith.constant 0 : index
    %3 = vector.load %arg12[%c0, %c0_1] : memref<8x128xbf16, #tpu.memory_space<vmem>>, vector<8x128xbf16>
    %c0_2 = arith.constant 0 : index
    %c0_3 = arith.constant 0 : index
    %4 = vector.load %arg7[%c0_2, %c0_3] : memref<128x128xbf16, #tpu.memory_space<vmem>>, vector<128x128xbf16>
    %cst = arith.constant dense<0.000000e+00> : vector<8x128xf32>
    %5 = tpu.matmul %3, %4, %cst {dimension_numbers = #tpu.dot_dimension_numbers<[1], [0], [0], [1], [0, 0, 1, 1], [], []>} : vector<8x128xbf16>, vector<128x128xbf16>, vector<8x128xf32> -> vector<8x128xf32>
    %c0_4 = arith.constant 0 : index
    %c0_5 = arith.constant 0 : index
    %6 = vector.load %arg8[%c0_4, %c0_5] : memref<1x128xf32, #tpu.memory_space<vmem>>, vector<1x128xf32>
    %7 = vector.broadcast %6 : vector<1x128xf32> to vector<8x128xf32>
    %8 = arith.addf %5, %7 : vector<8x128xf32>
    %c0_6 = arith.constant 0 : index
    %c0_7 = arith.constant 0 : index
    %9 = vector.load %arg9[%c0_6, %c0_7] : memref<8x128xf32, #tpu.memory_space<vmem>>, vector<8x128xf32>
    tpu.vector_store %arg9[%c0_6, %c0_7], %8 {strides = array<i32>} : memref<8x128xf32, #tpu.memory_space<vmem>>, vector<8x128xf32>,
    %c0_8 = arith.constant 0 : index
    %c0_9 = arith.constant 0 : index
    %10 = vector.load %arg13[%c0_8, %c0_9] : memref<8x1xf32, #tpu.memory_space<vmem>>, vector<8x1xf32>
    %cst_10 = arith.constant dense<0xFF800000> : vector<8xf32>
    %11 = vector.multi_reduction <maximumf>, %8, %cst_10 [1] : vector<8x128xf32> to vector<8xf32>
    %12 = vector.shape_cast %11 : vector<8xf32> to vector<8x1xf32>
    %13 = arith.maximumf %10, %12 : vector<8x1xf32>
    %c0_11 = arith.constant 0 : index
    %c0_12 = arith.constant 0 : index
    %14 = vector.load %arg14[%c0_11, %c0_12] : memref<8x1xf32, #tpu.memory_space<vmem>>, vector<8x1xf32>
    %15 = arith.subf %10, %13 : vector<8x1xf32>
    %16 = math.exp %15 : vector<8x1xf32>
    %17 = arith.mulf %14, %16 : vector<8x1xf32>
    %18 = vector.broadcast %13 : vector<8x1xf32> to vector<8x128xf32>
    %19 = arith.subf %8, %18 : vector<8x128xf32>
    %20 = math.exp %19 : vector<8x128xf32>
    %cst_13 = arith.constant dense<0.000000e+00> : vector<8xf32>
    %21 = vector.multi_reduction <add>, %20, %cst_13 [1] : vector<8x128xf32> to vector<8xf32>
    %22 = vector.shape_cast %21 : vector<8xf32> to vector<8x1xf32>
    %23 = arith.addf %17, %22 : vector<8x1xf32>
    %c0_14 = arith.constant 0 : index
    %c0_15 = arith.constant 0 : index
    %24 = vector.load %arg14[%c0_14, %c0_15] : memref<8x1xf32, #tpu.memory_space<vmem>>, vector<8x1xf32>
    tpu.vector_store %arg14[%c0_14, %c0_15], %23 {strides = array<i32>} : memref<8x1xf32, #tpu.memory_space<vmem>>, vector<8x1xf32>,
    %c0_16 = arith.constant 0 : index
    %c0_17 = arith.constant 0 : index
    %25 = vector.load %arg13[%c0_16, %c0_17] : memref<8x1xf32, #tpu.memory_space<vmem>>, vector<8x1xf32>
    tpu.vector_store %arg13[%c0_16, %c0_17], %13 {strides = array<i32>} : memref<8x1xf32, #tpu.memory_space<vmem>>, vector<8x1xf32>,
    %c0_i32_18 = arith.constant 0 : i32
    %26 = arith.cmpi eq, %arg0, %c0_i32_18 : i32
    %27 = arith.extui %26 : i1 to i32
    %c0_i32_19 = arith.constant 0 : i32
    %28 = arith.cmpi ne, %27, %c0_i32_19 : i32
    scf.if %28 {
      %c0_20 = arith.constant 0 : index
      %c0_21 = arith.constant 0 : index
      %29 = vector.load %arg13[%c0_20, %c0_21] : memref<8x1xf32, #tpu.memory_space<vmem>>, vector<8x1xf32>
      %c0_22 = arith.constant 0 : index
      %c0_23 = arith.constant 0 : index
      %30 = vector.load %arg14[%c0_22, %c0_23] : memref<8x1xf32, #tpu.memory_space<vmem>>, vector<8x1xf32>
      %31 = math.log %30 : vector<8x1xf32>
      %32 = arith.addf %29, %31 : vector<8x1xf32>
      %c0_24 = arith.constant 0 : index
      %c0_25 = arith.constant 0 : index
      %33 = vector.load %arg10[%c0_24, %c0_25] : memref<8x1xf32, #tpu.memory_space<vmem>>, vector<8x1xf32>
      tpu.vector_store %arg10[%c0_24, %c0_25], %32 {strides = array<i32>} : memref<8x1xf32, #tpu.memory_space<vmem>>, vector<8x1xf32>,
    } else {
    }
    return
  }
  func.func @transform_0(%arg0: i32) -> (i32, i32) {
    %c0_i32 = arith.constant 0 : i32
    %c0_i32_0 = arith.constant 0 : i32
    %c0_i32_1 = arith.constant 0 : i32
    return %c0_i32, %c0_i32_0 : i32, i32
  }
  func.func @transform_1(%arg0: i32) -> (i32, i32) {
    %c0_i32 = arith.constant 0 : i32
    %c0_i32_0 = arith.constant 0 : i32
    %c0_i32_1 = arith.constant 0 : i32
    return %c0_i32, %c0_i32_0 : i32, i32
  }
  func.func @transform_2(%arg0: i32) -> (i32, i32, i32) {
    %c0_i32 = arith.constant 0 : i32
    %c0_i32_0 = arith.constant 0 : i32
    %c0_i32_1 = arith.constant 0 : i32
    %c0_i32_2 = arith.constant 0 : i32
    return %c0_i32, %c0_i32_0, %c0_i32_1 : i32, i32, i32
  }
  func.func @transform_3(%arg0: i32) -> (i32, i32) {
    %c0_i32 = arith.constant 0 : i32
    %c0_i32_0 = arith.constant 0 : i32
    %c0_i32_1 = arith.constant 0 : i32
    return %c0_i32, %c0_i32_0 : i32, i32
  }
  func.func @transform_4(%arg0: i32) -> (i32, i32) {
    %c0_i32 = arith.constant 0 : i32
    %c0_i32_0 = arith.constant 0 : i32
    %c0_i32_1 = arith.constant 0 : i32
    return %c0_i32, %c0_i32_0 : i32, i32
  }
  func.func @transform_5(%arg0: i32) -> (i32, i32) {
    %c0_i32 = arith.constant 0 : i32
    %c0_i32_0 = arith.constant 0 : i32
    %c0_i32_1 = arith.constant 0 : i32
    return %c0_i32, %c0_i32_0 : i32, i32
  }
  func.func @transform_6(%arg0: i32) -> (i32, i32) {
    %c0_i32 = arith.constant 0 : i32
    %c0_i32_0 = arith.constant 0 : i32
    return %c0_i32, %arg0 : i32, i32
  }
  func.func @transform_7(%arg0: i32) -> (i32, i32) {
    %c0_i32 = arith.constant 0 : i32
    %c0_i32_0 = arith.constant 0 : i32
    return %c0_i32, %arg0 : i32, i32
  }
  func.func @transform_8(%arg0: i32) -> (i32, i32) {
    %c0_i32 = arith.constant 0 : i32
    %c0_i32_0 = arith.constant 0 : i32
    return %c0_i32, %arg0 : i32, i32
  }
  func.func @transform_9(%arg0: i32) -> (i32, i32) {
    %c0_i32 = arith.constant 0 : i32
    %c0_i32_0 = arith.constant 0 : i32
    %c0_i32_1 = arith.constant 0 : i32
    return %c0_i32, %c0_i32_0 : i32, i32
  }
  func.func @transform_10(%arg0: i32) -> (i32, i32) {
    %c0_i32 = arith.constant 0 : i32
    %c0_i32_0 = arith.constant 0 : i32
    %c0_i32_1 = arith.constant 0 : i32
    return %c0_i32, %c0_i32_0 : i32, i32
  }
}

</mosaic_0001>

<llo_original>
// kernel: tpu_custom_call.1
$region0: #{tpu_custom_call.1}
  #allocation0 [shape = 'u32[]', space=smem, size = 0x4, offset = 0x4, fixed_abs, tag = 'smem constant byte address 0x4 - core index']
  #allocation1 [shape = 'u32[144,128]{1,0:T(1,128)}', space=vmem, size = 0x12000, scoped, tag = 'internal scratch']
  #allocation2 [shape = 'bf16[8,128]{1,0:T(8,128)(2,1)}', space=vmem, size = 0x800, scoped, tag = 'scratch operand']
  #allocation3 [shape = 'f32[8,1]{1,0:T(8,128)}', space=vmem, size = 0x1000, scoped, tag = 'scratch operand']
  #allocation4 [shape = 'f32[8,1]{1,0:T(8,128)}', space=vmem, size = 0x1000, scoped, tag = 'scratch operand']
  %s0 = inlined_call_operand.hbm [shape: f32[8,128], index: 0, kind: input, shape index: {}]
  %s1 = inlined_call_operand.hbm [shape: f32[8,128], index: 1, kind: input, shape index: {}]
  %s2 = inlined_call_operand.hbm [shape: f32[8,8,128], index: 2, kind: input, shape index: {}]
  %s3 = inlined_call_operand.hbm [shape: f32[128,128], index: 3, kind: input, shape index: {}]
  %s4 = inlined_call_operand.hbm [shape: f32[128,128], index: 4, kind: input, shape index: {}]
  %s5 = inlined_call_operand.vmem [shape: f32[1,128], index: 5, kind: input, shape index: {}]
  %s6 = inlined_call_operand.hbm [shape: bf16[128,128], index: 6, kind: input, shape index: {}]
  %s7 = inlined_call_operand.vmem [shape: f32[1,128], index: 7, kind: input, shape index: {}]
  %s8 = inlined_call_operand.hbm [shape: f32[8,128], index: 8, kind: output, shape index: {0}]
  %s9 = inlined_call_operand.vmem [shape: f32[8,1], index: 9, kind: output, shape index: {1}]
  %s10 = inlined_call_operand.hbm [shape: f32[8,128], index: 10, kind: output, shape index: {2}]
  %11 = xla_tuple %s8, %s9, %s10
  %s12 = sld [smem:[#allocation0]]
  $region90: #{tpu_custom_call.1} parent=0
    _
  %s14 = ssub.s32 1, %s12
  %s15 = scalar_select 0, %s14, %s12
  $region1: #{tpu_custom_call.1} parent=0
    #allocation5 [shape = 'u8[4096]{0}', space=vmem, size = 0x1000, scoped, tag = 'input window, operand 0, single buffered']
    #allocation6 [shape = 's32[1]{0}', space=sflag, size = 0x4, scoped, tag = 'scoped memory for tpu_custom_call.1']
    #allocation7 [shape = 's32[1]{0}', space=sflag, size = 0x4, scoped, tag = 'scoped memory for tpu_custom_call.1']
    #allocation8 [shape = 'u8[4096]{0}', space=vmem, size = 0x1000, scoped, tag = 'input window, operand 1, single buffered']
    #allocation9 [shape = 's32[1]{0}', space=sflag, size = 0x4, scoped, tag = 'scoped memory for tpu_custom_call.1']
    #allocation10 [shape = 'u8[32768]{0}', space=vmem, size = 0x8000, scoped, tag = 'input window, operand 2, single buffered']
    #allocation11 [shape = 'u8[65536]{0}', space=vmem, size = 0x10000, scoped, tag = 'input window, operand 3, single buffered']
    #allocation12 [shape = 's32[1]{0}', space=sflag, size = 0x4, scoped, tag = 'scoped memory for tpu_custom_call.1']
    #allocation13 [shape = 'u8[65536]{0}', space=vmem, size = 0x10000, scoped, tag = 'input window, operand 4, single buffered']
    #allocation14 [shape = 'u8[32768]{0}', space=vmem, size = 0x8000, scoped, tag = 'input window, operand 6, single buffered']
    #allocation15 [shape = 's32[1]{0}', space=sflag, size = 0x4, scoped, tag = 'scoped memory for tpu_custom_call.1']
    #allocation16 [shape = 'u8[4096]{0}', space=vmem, size = 0x1000, scoped, tag = 'output window, operand 0, single buffered']
    #allocation17 [shape = 'u8[4096]{0}', space=vmem, size = 0x1000, scoped, tag = 'output window, operand 2, single buffered']
    #allocation18 [shape = 's32[1]{0}', space=sflag, size = 0x4, scoped, tag = 'scoped memory for tpu_custom_call.1']
    %16 = vsyncpa [#allocation6], 0
    %17 = vsyncpa [#allocation9], 0
    %18 = vsyncpa [#allocation12], 0
    %19 = vsyncpa [#allocation15], 0
    %20 = vsyncpa [#allocation7], 0
    %21 = vsyncpa [#allocation18], 0
    // Predicated region
    $region2: #{tpu_custom_call.1} parent=1 // pred_check
      _
    $region3: #{tpu_custom_call.1} parent=1 // pred_check_branch
      %23 = sbr.rel (0) target = $region5
    $region4: #{tpu_custom_call.1} parent=1 // pred_region
      %s25 = ssub.s32 128, 128
      %26 = vsyncadd [#allocation6], %s25
      %s28 = sshll.u32 [#allocation5], 4
      %s29 = int_to_ptr.vmem [resolvable:$true] %s28
      %31 = dma.hbm_to_vmem [thread:$0]  %s0, 128, %s29, [#allocation6]
    $region5: #{tpu_custom_call.1} parent=1 // pred_fallthru
      _
    // Predicated region
    $region6: #{tpu_custom_call.1} parent=1 // pred_check
      _
    $region7: #{tpu_custom_call.1} parent=1 // pred_check_branch
      %33 = sbr.rel (0) target = $region9
    $region8: #{tpu_custom_call.1} parent=1 // pred_region
      %s35 = ssub.s32 128, 128
      %36 = vsyncadd [#allocation9], %s35
      %s38 = sshll.u32 [#allocation8], 4
      %s39 = int_to_ptr.vmem [resolvable:$true] %s38
      %41 = dma.hbm_to_vmem [thread:$0]  %s1, 128, %s39, [#allocation9]
    $region9: #{tpu_custom_call.1} parent=1 // pred_fallthru
      _
    // Predicated region
    $region10: #{tpu_custom_call.1} parent=1 // pred_check
      _
    $region11: #{tpu_custom_call.1} parent=1 // pred_check_branch
      %43 = sbr.rel (0) target = $region13
    $region12: #{tpu_custom_call.1} parent=1 // pred_region
      %s45 = ssub.s32 1024, 1024
      %46 = vsyncadd [#allocation9], %s45
      %s47 = sshll.u32 [#allocation10], 4
      %s48 = int_to_ptr.vmem [resolvable:$true] %s47
      %53 = dma.hbm_to_vmem [thread:$0]  %s2, 1024, %s48, [#allocation9], 128, 128, 8
    $region13: #{tpu_custom_call.1} parent=1 // pred_fallthru
      _
    // Predicated region
    $region14: #{tpu_custom_call.1} parent=1 // pred_check
      _
    $region15: #{tpu_custom_call.1} parent=1 // pred_check_branch
      %55 = sbr.rel (0) target = $region17
    $region16: #{tpu_custom_call.1} parent=1 // pred_region
      %s57 = ssub.s32 2048, 2048
      %58 = vsyncadd [#allocation12], %s57
      %s59 = sshll.u32 [#allocation11], 4
      %s60 = int_to_ptr.vmem [resolvable:$true] %s59
      %65 = dma.hbm_to_vmem [thread:$0]  %s3, 2048, %s60, [#allocation12], 128, 128, 8
    $region17: #{tpu_custom_call.1} parent=1 // pred_fallthru
      _
    // Predicated region
    $region18: #{tpu_custom_call.1} parent=1 // pred_check
      _
    $region19: #{tpu_custom_call.1} parent=1 // pred_check_branch
      %67 = sbr.rel (0) target = $region21
    $region20: #{tpu_custom_call.1} parent=1 // pred_region
      %s69 = ssub.s32 2048, 2048
      %70 = vsyncadd [#allocation12], %s69
      %s71 = sshll.u32 [#allocation13], 4
      %s72 = int_to_ptr.vmem [resolvable:$true] %s71
      %77 = dma.hbm_to_vmem [thread:$0]  %s4, 2048, %s72, [#allocation12], 128, 128, 8
    $region21: #{tpu_custom_call.1} parent=1 // pred_fallthru
      _
    // Predicated region
    $region22: #{tpu_custom_call.1} parent=1 // pred_check
      _
    $region23: #{tpu_custom_call.1} parent=1 // pred_check_branch
      %79 = sbr.rel (0) target = $region25
    $region24: #{tpu_custom_call.1} parent=1 // pred_region
      _
    $region25: #{tpu_custom_call.1} parent=1 // pred_fallthru
      _
    // Predicated region
    $region26: #{tpu_custom_call.1} parent=1 // pred_check
      _
    $region27: #{tpu_custom_call.1} parent=1 // pred_check_branch
      %81 = sbr.rel (0) target = $region29
    $region28: #{tpu_custom_call.1} parent=1 // pred_region
      %s83 = ssub.s32 1024, 1024
      %84 = vsyncadd [#allocation15], %s83
      %s85 = sshll.u32 [#allocation14], 4
      %s86 = int_to_ptr.vmem [resolvable:$true] %s85
      %91 = dma.hbm_to_vmem [thread:$0]  %s6, 1024, %s86, [#allocation15], 64, 64, 4
    $region29: #{tpu_custom_call.1} parent=1 // pred_fallthru
      _
    // Predicated region
    $region30: #{tpu_custom_call.1} parent=1 // pred_check
      _
    $region31: #{tpu_custom_call.1} parent=1 // pred_check_branch
      %93 = sbr.rel (0) target = $region33
    $region32: #{tpu_custom_call.1} parent=1 // pred_region
      _
    $region33: #{tpu_custom_call.1} parent=1 // pred_fallthru
      _
    // Predicated region
    $region34: #{tpu_custom_call.1} parent=1 // pred_check
      _
    $region35: #{tpu_custom_call.1} parent=1 // pred_check_branch
      %95 = sbr.rel (0) target = $region37
    $region36: #{tpu_custom_call.1} parent=1 // pred_region
      %96 = dma.done [#allocation6], 128
    $region37: #{tpu_custom_call.1} parent=1 // pred_fallthru
      _
    // Predicated region
    $region38: #{tpu_custom_call.1} parent=1 // pred_check
      _
    $region39: #{tpu_custom_call.1} parent=1 // pred_check_branch
      %98 = sbr.rel (0) target = $region41
    $region40: #{tpu_custom_call.1} parent=1 // pred_region
      %99 = dma.done [#allocation9], 128
    $region41: #{tpu_custom_call.1} parent=1 // pred_fallthru
      _
    // Predicated region
    $region42: #{tpu_custom_call.1} parent=1 // pred_check
      _
    $region43: #{tpu_custom_call.1} parent=1 // pred_check_branch
      %101 = sbr.rel (0) target = $region45
    $region44: #{tpu_custom_call.1} parent=1 // pred_region
      %102 = dma.done [#allocation9], 1024
    $region45: #{tpu_custom_call.1} parent=1 // pred_fallthru
      _
    // Predicated region
    $region46: #{tpu_custom_call.1} parent=1 // pred_check
      _
    $region47: #{tpu_custom_call.1} parent=1 // pred_check_branch
      %104 = sbr.rel (0) target = $region49
    $region48: #{tpu_custom_call.1} parent=1 // pred_region
      %105 = dma.done [#allocation12], 2048
    $region49: #{tpu_custom_call.1} parent=1 // pred_fallthru
      _
    // Predicated region
    $region50: #{tpu_custom_call.1} parent=1 // pred_check
      _
    $region51: #{tpu_custom_call.1} parent=1 // pred_check_branch
      %107 = sbr.rel (0) target = $region53
    $region52: #{tpu_custom_call.1} parent=1 // pred_region
      %108 = dma.done [#allocation12], 2048
    $region53: #{tpu_custom_call.1} parent=1 // pred_fallthru
      _
    // Predicated region
    $region54: #{tpu_custom_call.1} parent=1 // pred_check
      _
    $region55: #{tpu_custom_call.1} parent=1 // pred_check_branch
      %110 = sbr.rel (0) target = $region57
    $region56: #{tpu_custom_call.1} parent=1 // pred_region
      %111 = dma.done [#allocation15], 1024
    $region57: #{tpu_custom_call.1} parent=1 // pred_fallthru
      _
    %p113 = scmp.eq.s32.totalorder 0, 0
    // Predicated region
    $region58: #{tpu_custom_call.1} parent=1 // pred_check
      %p114 = pneg %p113
    $region59: #{tpu_custom_call.1} parent=1 // pred_check_branch
      %116 = sbr.rel (%p114) target = $region61
    $region60: #{tpu_custom_call.1} parent=1 // pred_region
      %v117 = vld [vmem:[#allocation5] sm:$0xff]
      %v118 = vld [vmem:[#allocation8] sm:$0xff]
      %v119 = vld [vmem:[#allocation10] sm:$0xff]
      %v120 = vld [vmem:[#allocation10 + $0x8] sm:$0xff]
      %v121 = vld [vmem:[#allocation10 + $0x10] sm:$0xff]
      %v122 = vld [vmem:[#allocation10 + $0x18] sm:$0xff]
      %v123 = vld [vmem:[#allocation10 + $0x20] sm:$0xff]
      %v124 = vld [vmem:[#allocation10 + $0x28] sm:$0xff]
      %v125 = vld [vmem:[#allocation10 + $0x30] sm:$0xff]
      %v126 = vld [vmem:[#allocation10 + $0x38] sm:$0xff]
      %v128 = vcombine.high %v118, %v118
      %v130 = vunpack.c.l.s4 1966171168
      %v131 = vunpack.c.0.s8 %v130
      %v132 = vlaneseq
      %v133 = vshrl.u32 %v132, 7
      %v134 = vsub.s32 %v131, %v133
      %v135 = vrot.slane %v118, %v134
      %v137 = vunpack.c.l.s4 1966171168
      %v138 = vunpack.c.0.s8 %v137
      %v139 = vlaneseq
      %v140 = vshrl.u32 %v139, 7
      %v141 = vsub.s32 %v138, %v140
      %v142 = vrot.slane %v128, %v141
      %v143 = vcombine.high %v135, %v135
      %v144 = vcombine.high %v142, %v142
      %v146 = vunpack.c.l.s4 1966171168
      %v147 = vunpack.c.0.s8 %v146
      %v148 = vlaneseq
      %v149 = vshrl.u32 %v148, 7
      %v150 = vsub.s32 %v147, %v149
      %v151 = vrot.slane %v135, %v150
      %v153 = vunpack.c.l.s4 1966171168
      %v154 = vunpack.c.0.s8 %v153
      %v155 = vlaneseq
      %v156 = vshrl.u32 %v155, 7
      %v157 = vsub.s32 %v154, %v156
      %v158 = vrot.slane %v142, %v157
      %v160 = vunpack.c.l.s4 1966171168
      %v161 = vunpack.c.0.s8 %v160
      %v162 = vlaneseq
      %v163 = vshrl.u32 %v162, 7
      %v164 = vsub.s32 %v161, %v163
      %v165 = vrot.slane %v143, %v164
      %v167 = vunpack.c.l.s4 1966171168
      %v168 = vunpack.c.0.s8 %v167
      %v169 = vlaneseq
      %v170 = vshrl.u32 %v169, 7
      %v171 = vsub.s32 %v168, %v170
      %v172 = vrot.slane %v144, %v171
      %v173 = vcombine.high %v151, %v151
      %v174 = vcombine.high %v158, %v158
      %v175 = vcombine.high %v165, %v165
      %v176 = vcombine.high %v172, %v172
      %v177 = vlaneseq
      %v178 = vshrl.u32 %v177, 7
      %v179 = vsub.s32 0, %v178
      %v180 = vrot.slane %v151, %v179
      %v181 = vlaneseq
      %v182 = vshrl.u32 %v181, 7
      %v183 = vsub.s32 0, %v182
      %v184 = vrot.slane %v165, %v183
      %v185 = vlaneseq
      %v186 = vshrl.u32 %v185, 7
      %v187 = vsub.s32 0, %v186
      %v188 = vrot.slane %v173, %v187
      %v189 = vlaneseq
      %v190 = vshrl.u32 %v189, 7
      %v191 = vsub.s32 0, %v190
      %v192 = vrot.slane %v175, %v191
      %v193 = vlaneseq
      %v194 = vshrl.u32 %v193, 7
      %v195 = vsub.s32 0, %v194
      %v196 = vrot.slane %v158, %v195
      %v197 = vlaneseq
      %v198 = vshrl.u32 %v197, 7
      %v199 = vsub.s32 0, %v198
      %v200 = vrot.slane %v172, %v199
      %v201 = vlaneseq
      %v202 = vshrl.u32 %v201, 7
      %v203 = vsub.s32 0, %v202
      %v204 = vrot.slane %v174, %v203
      %v205 = vlaneseq
      %v206 = vshrl.u32 %v205, 7
      %v207 = vsub.s32 0, %v206
      %v208 = vrot.slane %v176, %v207
      %v217 = vmul.f32 %v119, %v180
      %v218 = vmul.f32 %v120, %v184
      %v219 = vmul.f32 %v121, %v188
      %v220 = vmul.f32 %v122, %v192
      %v221 = vmul.f32 %v123, %v196
      %v222 = vmul.f32 %v124, %v200
      %v223 = vmul.f32 %v125, %v204
      %v224 = vmul.f32 %v126, %v208
      %225 = vadd.xlane.f32.xlu0 %v217
      %v226 = vpop.xlane.xlu0 %225
      %227 = vadd.xlane.f32.xlu0 %v218
      %v228 = vpop.xlane.xlu0 %227
      %229 = vadd.xlane.f32.xlu0 %v219
      %v230 = vpop.xlane.xlu0 %229
      %231 = vadd.xlane.f32.xlu0 %v220
      %v232 = vpop.xlane.xlu0 %231
      %233 = vadd.xlane.f32.xlu0 %v221
      %v234 = vpop.xlane.xlu0 %233
      %235 = vadd.xlane.f32.xlu0 %v222
      %v236 = vpop.xlane.xlu0 %235
      %237 = vadd.xlane.f32.xlu0 %v223
      %v238 = vpop.xlane.xlu0 %237
      %239 = vadd.xlane.f32.xlu0 %v224
      %v240 = vpop.xlane.xlu0 %239
      %v241 = vmul.f32 %v118, %v118
      %242 = vadd.xlane.f32.xlu0 %v241
      %v243 = vpop.xlane.xlu0 %242
      %v244 = vmul.f32 %v119, %v119
      %v245 = vmul.f32 %v120, %v120
      %v246 = vmul.f32 %v121, %v121
      %v247 = vmul.f32 %v122, %v122
      %v248 = vmul.f32 %v123, %v123
      %v249 = vmul.f32 %v124, %v124
      %v250 = vmul.f32 %v125, %v125
      %v251 = vmul.f32 %v126, %v126
      %252 = vadd.xlane.f32.xlu0 %v244
      %v253 = vpop.xlane.xlu0 %252
      %254 = vadd.xlane.f32.xlu0 %v245
      %v255 = vpop.xlane.xlu0 %254
      %256 = vadd.xlane.f32.xlu0 %v246
      %v257 = vpop.xlane.xlu0 %256
      %258 = vadd.xlane.f32.xlu0 %v247
      %v259 = vpop.xlane.xlu0 %258
      %260 = vadd.xlane.f32.xlu0 %v248
      %v261 = vpop.xlane.xlu0 %260
      %262 = vadd.xlane.f32.xlu0 %v249
      %v263 = vpop.xlane.xlu0 %262
      %264 = vadd.xlane.f32.xlu0 %v250
      %v265 = vpop.xlane.xlu0 %264
      %266 = vadd.xlane.f32.xlu0 %v251
      %v267 = vpop.xlane.xlu0 %266
      %v276 = vlaneseq
      %v277 = vand.u32 %v276, 127
      %v278 = vlaneseq
      %v279 = vshrl.u32 %v278, 7
      %v280 = vsub.s32 %v277, %v279
      %v281 = vrot.slane %v253, %v280
      %v282 = vlaneseq
      %v283 = vshrl.u32 %v282, 7
      %v284 = vsub.s32 %v277, %v283
      %v285 = vrot.slane %v255, %v284
      %v286 = vlaneseq
      %v287 = vshrl.u32 %v286, 7
      %v288 = vsub.s32 %v277, %v287
      %v289 = vrot.slane %v257, %v288
      %v290 = vlaneseq
      %v291 = vshrl.u32 %v290, 7
      %v292 = vsub.s32 %v277, %v291
      %v293 = vrot.slane %v259, %v292
      %v294 = vlaneseq
      %v295 = vshrl.u32 %v294, 7
      %v296 = vsub.s32 %v277, %v295
      %v297 = vrot.slane %v261, %v296
      %v298 = vlaneseq
      %v299 = vshrl.u32 %v298, 7
      %v300 = vsub.s32 %v277, %v299
      %v301 = vrot.slane %v263, %v300
      %v302 = vlaneseq
      %v303 = vshrl.u32 %v302, 7
      %v304 = vsub.s32 %v277, %v303
      %v305 = vrot.slane %v265, %v304
      %v306 = vlaneseq
      %v307 = vshrl.u32 %v306, 7
      %v308 = vsub.s32 %v277, %v307
      %v309 = vrot.slane %v267, %v308
      %vm310 = vcmask 1041409
      %v311 = vsel %vm310, %v285, %v281
      %vm312 = vcmask 1042434
      %v313 = vsel %vm312, %v289, %v311
      %vm314 = vcmask 1043459
      %v315 = vsel %vm314, %v293, %v313
      %vm316 = vcmask 1044484
      %v317 = vsel %vm316, %v297, %v315
      %vm318 = vcmask 1045509
      %v319 = vsel %vm318, %v301, %v317
      %vm320 = vcmask 1046534
      %v321 = vsel %vm320, %v305, %v319
      %vm322 = vcmask 1047559
      %v323 = vsel %vm322, %v309, %v321
      %v325 = vmul.f32 %v243, %v323
      %v326 = vrsqrt.pop %v325
      %v328 = vlaneseq
      %v329 = vshrl.u32 %v328, 7
      %v330 = vsub.s32 0, %v329
      %v331 = vrot.slane %v326, %v330
      %333 = vbcast.lane.b32.xlu0 %v331, 256
      %v334 = vpop.permute.xlu0 %333
      %v335 = vlaneseq
      %v336 = vshrl.u32 %v335, 7
      %v337 = vsub.s32 1, %v336
      %v338 = vrot.slane %v326, %v337
      %340 = vbcast.lane.b32.xlu0 %v338, 256
      %v341 = vpop.permute.xlu0 %340
      %v342 = vlaneseq
      %v343 = vshrl.u32 %v342, 7
      %v344 = vsub.s32 2, %v343
      %v345 = vrot.slane %v326, %v344
      %347 = vbcast.lane.b32.xlu0 %v345, 256
      %v348 = vpop.permute.xlu0 %347
      %v349 = vlaneseq
      %v350 = vshrl.u32 %v349, 7
      %v351 = vsub.s32 3, %v350
      %v352 = vrot.slane %v326, %v351
      %354 = vbcast.lane.b32.xlu0 %v352, 256
      %v355 = vpop.permute.xlu0 %354
      %v356 = vlaneseq
      %v357 = vshrl.u32 %v356, 7
      %v358 = vsub.s32 4, %v357
      %v359 = vrot.slane %v326, %v358
      %361 = vbcast.lane.b32.xlu0 %v359, 256
      %v362 = vpop.permute.xlu0 %361
      %v363 = vlaneseq
      %v364 = vshrl.u32 %v363, 7
      %v365 = vsub.s32 5, %v364
      %v366 = vrot.slane %v326, %v365
      %368 = vbcast.lane.b32.xlu0 %v366, 256
      %v369 = vpop.permute.xlu0 %368
      %v370 = vlaneseq
      %v371 = vshrl.u32 %v370, 7
      %v372 = vsub.s32 6, %v371
      %v373 = vrot.slane %v326, %v372
      %375 = vbcast.lane.b32.xlu0 %v373, 256
      %v376 = vpop.permute.xlu0 %375
      %v377 = vlaneseq
      %v378 = vshrl.u32 %v377, 7
      %v379 = vsub.s32 7, %v378
      %v380 = vrot.slane %v326, %v379
      %382 = vbcast.lane.b32.xlu0 %v380, 256
      %v383 = vpop.permute.xlu0 %382
      %v392 = vmul.f32 %v226, %v334
      %v393 = vmul.f32 %v228, %v341
      %v394 = vmul.f32 %v230, %v348
      %v395 = vmul.f32 %v232, %v355
      %v396 = vmul.f32 %v234, %v362
      %v397 = vmul.f32 %v236, %v369
      %v398 = vmul.f32 %v238, %v376
      %v399 = vmul.f32 %v240, %v383
      %408 = vset.pattern.permute.xlu0 0
      %409 = vperm.xlu0 %408, %v392
      %v410 = vpop.permute.xlu0 %409
      %411 = vset.pattern.permute.xlu0 0
      %412 = vperm.xlu0 %411, %v393
      %v413 = vpop.permute.xlu0 %412
      %414 = vset.pattern.permute.xlu0 0
      %415 = vperm.xlu0 %414, %v394
      %v416 = vpop.permute.xlu0 %415
      %417 = vset.pattern.permute.xlu0 0
      %418 = vperm.xlu0 %417, %v395
      %v419 = vpop.permute.xlu0 %418
      %420 = vset.pattern.permute.xlu0 0
      %421 = vperm.xlu0 %420, %v396
      %v422 = vpop.permute.xlu0 %421
      %423 = vset.pattern.permute.xlu0 0
      %424 = vperm.xlu0 %423, %v397
      %v425 = vpop.permute.xlu0 %424
      %426 = vset.pattern.permute.xlu0 0
      %427 = vperm.xlu0 %426, %v398
      %v428 = vpop.permute.xlu0 %427
      %429 = vset.pattern.permute.xlu0 0
      %430 = vperm.xlu0 %429, %v399
      %v431 = vpop.permute.xlu0 %430
      %v432 = vlaneseq
      %v433 = vshrl.u32 %v432, 7
      %v434 = vsub.s32 %v277, %v433
      %v435 = vrot.slane %v410, %v434
      %v436 = vlaneseq
      %v437 = vshrl.u32 %v436, 7
      %v438 = vsub.s32 %v277, %v437
      %v439 = vrot.slane %v413, %v438
      %v440 = vlaneseq
      %v441 = vshrl.u32 %v440, 7
      %v442 = vsub.s32 %v277, %v441
      %v443 = vrot.slane %v416, %v442
      %v444 = vlaneseq
      %v445 = vshrl.u32 %v444, 7
      %v446 = vsub.s32 %v277, %v445
      %v447 = vrot.slane %v419, %v446
      %v448 = vlaneseq
      %v449 = vshrl.u32 %v448, 7
      %v450 = vsub.s32 %v277, %v449
      %v451 = vrot.slane %v422, %v450
      %v452 = vlaneseq
      %v453 = vshrl.u32 %v452, 7
      %v454 = vsub.s32 %v277, %v453
      %v455 = vrot.slane %v425, %v454
      %v456 = vlaneseq
      %v457 = vshrl.u32 %v456, 7
      %v458 = vsub.s32 %v277, %v457
      %v459 = vrot.slane %v428, %v458
      %v460 = vlaneseq
      %v461 = vshrl.u32 %v460, 7
      %v462 = vsub.s32 %v277, %v461
      %v463 = vrot.slane %v431, %v462
      %v464 = vsel %vm310, %v439, %v435
      %v465 = vsel %vm312, %v443, %v464
      %v466 = vsel %vm314, %v447, %v465
      %v467 = vsel %vm316, %v451, %v466
      %v468 = vsel %vm318, %v455, %v467
      %v469 = vsel %vm320, %v459, %v468
      %v470 = vsel %vm322, %v463, %v469
      %vm472 = vcmask 64512
      %v473 = vsel %vm472, %v470, -inf
      %474 = vmax.xlane.f32.xlu0 %v473
      %v475 = vpop.xlane.xlu0 %474
      %v477 = vlaneseq
      %v478 = vshrl.u32 %v477, 7
      %v479 = vsub.s32 0, %v478
      %v480 = vrot.slane %v475, %v479
      %v481 = vlaneseq
      %v482 = vshrl.u32 %v481, 7
      %v483 = vsub.s32 1, %v482
      %v484 = vrot.slane %v475, %v483
      %v485 = vlaneseq
      %v486 = vshrl.u32 %v485, 7
      %v487 = vsub.s32 2, %v486
      %v488 = vrot.slane %v475, %v487
      %v489 = vlaneseq
      %v490 = vshrl.u32 %v489, 7
      %v491 = vsub.s32 3, %v490
      %v492 = vrot.slane %v475, %v491
      %v493 = vlaneseq
      %v494 = vshrl.u32 %v493, 7
      %v495 = vsub.s32 4, %v494
      %v496 = vrot.slane %v475, %v495
      %v497 = vlaneseq
      %v498 = vshrl.u32 %v497, 7
      %v499 = vsub.s32 5, %v498
      %v500 = vrot.slane %v475, %v499
      %v501 = vlaneseq
      %v502 = vshrl.u32 %v501, 7
      %v503 = vsub.s32 6, %v502
      %v504 = vrot.slane %v475, %v503
      %v505 = vlaneseq
      %v506 = vshrl.u32 %v505, 7
      %v507 = vsub.s32 7, %v506
      %v508 = vrot.slane %v475, %v507
      %v517 = vsub.f32 %v392, %v480
      %v518 = vsub.f32 %v393, %v484
      %v519 = vsub.f32 %v394, %v488
      %v520 = vsub.f32 %v395, %v492
      %v521 = vsub.f32 %v396, %v496
      %v522 = vsub.f32 %v397, %v500
      %v523 = vsub.f32 %v398, %v504
      %v524 = vsub.f32 %v399, %v508
      %v525 = vmul.f32 %v517, 1.442695
      %v526 = vpow.pop %v525
      %v527 = vmul.f32 %v518, 1.442695
      %v528 = vpow.pop %v527
      %v529 = vmul.f32 %v519, 1.442695
      %v530 = vpow.pop %v529
      %v531 = vmul.f32 %v520, 1.442695
      %v532 = vpow.pop %v531
      %v533 = vmul.f32 %v521, 1.442695
      %v534 = vpow.pop %v533
      %v535 = vmul.f32 %v522, 1.442695
      %v536 = vpow.pop %v535
      %v537 = vmul.f32 %v523, 1.442695
      %v538 = vpow.pop %v537
      %v539 = vmul.f32 %v524, 1.442695
      %v540 = vpow.pop %v539
      %549 = vset.pattern.permute.xlu0 0
      %550 = vperm.xlu0 %549, %v526
      %v551 = vpop.permute.xlu0 %550
      %552 = vset.pattern.permute.xlu0 0
      %553 = vperm.xlu0 %552, %v528
      %v554 = vpop.permute.xlu0 %553
      %555 = vset.pattern.permute.xlu0 0
      %556 = vperm.xlu0 %555, %v530
      %v557 = vpop.permute.xlu0 %556
      %558 = vset.pattern.permute.xlu0 0
      %559 = vperm.xlu0 %558, %v532
      %v560 = vpop.permute.xlu0 %559
      %561 = vset.pattern.permute.xlu0 0
      %562 = vperm.xlu0 %561, %v534
      %v563 = vpop.permute.xlu0 %562
      %564 = vset.pattern.permute.xlu0 0
      %565 = vperm.xlu0 %564, %v536
      %v566 = vpop.permute.xlu0 %565
      %567 = vset.pattern.permute.xlu0 0
      %568 = vperm.xlu0 %567, %v538
      %v569 = vpop.permute.xlu0 %568
      %570 = vset.pattern.permute.xlu0 0
      %571 = vperm.xlu0 %570, %v540
      %v572 = vpop.permute.xlu0 %571
      %v573 = vlaneseq
      %v574 = vshrl.u32 %v573, 7
      %v575 = vsub.s32 %v277, %v574
      %v576 = vrot.slane %v551, %v575
      %v577 = vlaneseq
      %v578 = vshrl.u32 %v577, 7
      %v579 = vsub.s32 %v277, %v578
      %v580 = vrot.slane %v554, %v579
      %v581 = vlaneseq
      %v582 = vshrl.u32 %v581, 7
      %v583 = vsub.s32 %v277, %v582
      %v584 = vrot.slane %v557, %v583
      %v585 = vlaneseq
      %v586 = vshrl.u32 %v585, 7
      %v587 = vsub.s32 %v277, %v586
      %v588 = vrot.slane %v560, %v587
      %v589 = vlaneseq
      %v590 = vshrl.u32 %v589, 7
      %v591 = vsub.s32 %v277, %v590
      %v592 = vrot.slane %v563, %v591
      %v593 = vlaneseq
      %v594 = vshrl.u32 %v593, 7
      %v595 = vsub.s32 %v277, %v594
      %v596 = vrot.slane %v566, %v595
      %v597 = vlaneseq
      %v598 = vshrl.u32 %v597, 7
      %v599 = vsub.s32 %v277, %v598
      %v600 = vrot.slane %v569, %v599
      %v601 = vlaneseq
      %v602 = vshrl.u32 %v601, 7
      %v603 = vsub.s32 %v277, %v602
      %v604 = vrot.slane %v572, %v603
      %v605 = vsel %vm310, %v580, %v576
      %v606 = vsel %vm312, %v584, %v605
      %v607 = vsel %vm314, %v588, %v606
      %v608 = vsel %vm316, %v592, %v607
      %v609 = vsel %vm318, %v596, %v608
      %v610 = vsel %vm320, %v600, %v609
      %v611 = vsel %vm322, %v604, %v610
      %v613 = vsel %vm472, %v611, 0.0
      %614 = vadd.xlane.f32.xlu0 %v613
      %v615 = vpop.xlane.xlu0 %614
      %v617 = vlaneseq
      %v618 = vshrl.u32 %v617, 7
      %v619 = vsub.s32 0, %v618
      %v620 = vrot.slane %v615, %v619
      %v621 = vlaneseq
      %v622 = vshrl.u32 %v621, 7
      %v623 = vsub.s32 1, %v622
      %v624 = vrot.slane %v615, %v623
      %v625 = vlaneseq
      %v626 = vshrl.u32 %v625, 7
      %v627 = vsub.s32 2, %v626
      %v628 = vrot.slane %v615, %v627
      %v629 = vlaneseq
      %v630 = vshrl.u32 %v629, 7
      %v631 = vsub.s32 3, %v630
      %v632 = vrot.slane %v615, %v631
      %v633 = vlaneseq
      %v634 = vshrl.u32 %v633, 7
      %v635 = vsub.s32 4, %v634
      %v636 = vrot.slane %v615, %v635
      %v637 = vlaneseq
      %v638 = vshrl.u32 %v637, 7
      %v639 = vsub.s32 5, %v638
      %v640 = vrot.slane %v615, %v639
      %v641 = vlaneseq
      %v642 = vshrl.u32 %v641, 7
      %v643 = vsub.s32 6, %v642
      %v644 = vrot.slane %v615, %v643
      %v645 = vlaneseq
      %v646 = vshrl.u32 %v645, 7
      %v647 = vsub.s32 7, %v646
      %v648 = vrot.slane %v615, %v647
      %v657 = vrcp.pop %v620
      %v658 = vmul.f32 %v526, %v657
      %v659 = vrcp.pop %v624
      %v660 = vmul.f32 %v528, %v659
      %v661 = vrcp.pop %v628
      %v662 = vmul.f32 %v530, %v661
      %v663 = vrcp.pop %v632
      %v664 = vmul.f32 %v532, %v663
      %v665 = vrcp.pop %v636
      %v666 = vmul.f32 %v534, %v665
      %v667 = vrcp.pop %v640
      %v668 = vmul.f32 %v536, %v667
      %v669 = vrcp.pop %v644
      %v670 = vmul.f32 %v538, %v669
      %v671 = vrcp.pop %v648
      %v672 = vmul.f32 %v540, %v671
      %674 = vset.pattern.permute.xlu0 0
      %675 = vperm.xlu0 %674, %v658
      %v676 = vpop.permute.xlu0 %675
      %679 = vset.pattern.permute.xlu0 0
      %680 = vperm.xlu0 %679, %v660
      %v681 = vpop.permute.xlu0 %680
      %684 = vset.pattern.permute.xlu0 0
      %685 = vperm.xlu0 %684, %v662
      %v686 = vpop.permute.xlu0 %685
      %689 = vset.pattern.permute.xlu0 0
      %690 = vperm.xlu0 %689, %v664
      %v691 = vpop.permute.xlu0 %690
      %694 = vset.pattern.permute.xlu0 0
      %695 = vperm.xlu0 %694, %v666
      %v696 = vpop.permute.xlu0 %695
      %699 = vset.pattern.permute.xlu0 0
      %700 = vperm.xlu0 %699, %v668
      %v701 = vpop.permute.xlu0 %700
      %704 = vset.pattern.permute.xlu0 0
      %705 = vperm.xlu0 %704, %v670
      %v706 = vpop.permute.xlu0 %705
      %709 = vset.pattern.permute.xlu0 0
      %710 = vperm.xlu0 %709, %v672
      %v711 = vpop.permute.xlu0 %710
      %v713 = vmul.f32 %v676, %v119
      %v714 = vmul.f32 %v681, %v120
      %v715 = vmul.f32 %v686, %v121
      %v716 = vmul.f32 %v691, %v122
      %v717 = vmul.f32 %v696, %v123
      %v718 = vmul.f32 %v701, %v124
      %v719 = vmul.f32 %v706, %v125
      %v720 = vmul.f32 %v711, %v126
      %v721 = vrot.slane %v713, 4
      %v722 = vadd.f32 %v713, %v721
      %v723 = vrot.slane %v722, 2
      %v724 = vadd.f32 %v722, %v723
      %v725 = vrot.slane %v724, 1
      %v726 = vadd.f32 %v724, %v725
      %v727 = vrot.slane %v714, 4
      %v728 = vadd.f32 %v714, %v727
      %v729 = vrot.slane %v728, 2
      %v730 = vadd.f32 %v728, %v729
      %v731 = vrot.slane %v730, 1
      %v732 = vadd.f32 %v730, %v731
      %v733 = vrot.slane %v715, 4
      %v734 = vadd.f32 %v715, %v733
      %v735 = vrot.slane %v734, 2
      %v736 = vadd.f32 %v734, %v735
      %v737 = vrot.slane %v736, 1
      %v738 = vadd.f32 %v736, %v737
      %v739 = vrot.slane %v716, 4
      %v740 = vadd.f32 %v716, %v739
      %v741 = vrot.slane %v740, 2
      %v742 = vadd.f32 %v740, %v741
      %v743 = vrot.slane %v742, 1
      %v744 = vadd.f32 %v742, %v743
      %v745 = vrot.slane %v717, 4
      %v746 = vadd.f32 %v717, %v745
      %v747 = vrot.slane %v746, 2
      %v748 = vadd.f32 %v746, %v747
      %v749 = vrot.slane %v748, 1
      %v750 = vadd.f32 %v748, %v749
      %v751 = vrot.slane %v718, 4
      %v752 = vadd.f32 %v718, %v751
      %v753 = vrot.slane %v752, 2
      %v754 = vadd.f32 %v752, %v753
      %v755 = vrot.slane %v754, 1
      %v756 = vadd.f32 %v754, %v755
      %v757 = vrot.slane %v719, 4
      %v758 = vadd.f32 %v719, %v757
      %v759 = vrot.slane %v758, 2
      %v760 = vadd.f32 %v758, %v759
      %v761 = vrot.slane %v760, 1
      %v762 = vadd.f32 %v760, %v761
      %v763 = vrot.slane %v720, 4
      %v764 = vadd.f32 %v720, %v763
      %v765 = vrot.slane %v764, 2
      %v766 = vadd.f32 %v764, %v765
      %v767 = vrot.slane %v766, 1
      %v768 = vadd.f32 %v766, %v767
      %v769 = vld [vmem:[#allocation11] sm:$0xff]
      %v770 = vld [vmem:[#allocation11 + $0x8] sm:$0xff]
      %v771 = vld [vmem:[#allocation11 + $0x10] sm:$0xff]
      %v772 = vld [vmem:[#allocation11 + $0x18] sm:$0xff]
      %v773 = vld [vmem:[#allocation11 + $0x20] sm:$0xff]
      %v774 = vld [vmem:[#allocation11 + $0x28] sm:$0xff]
      %v775 = vld [vmem:[#allocation11 + $0x30] sm:$0xff]
      %v776 = vld [vmem:[#allocation11 + $0x38] sm:$0xff]
      %v777 = vld [vmem:[#allocation11 + $0x40] sm:$0xff]
      %v778 = vld [vmem:[#allocation11 + $0x48] sm:$0xff]
      %v779 = vld [vmem:[#allocation11 + $0x50] sm:$0xff]
      %v780 = vld [vmem:[#allocation11 + $0x58] sm:$0xff]
      %v781 = vld [vmem:[#allocation11 + $0x60] sm:$0xff]
      %v782 = vld [vmem:[#allocation11 + $0x68] sm:$0xff]
      %v783 = vld [vmem:[#allocation11 + $0x70] sm:$0xff]
      %v784 = vld [vmem:[#allocation11 + $0x78] sm:$0xff]
      %v785 = vld [vmem:[#allocation13] sm:$0xff]
      %v786 = vld [vmem:[#allocation13 + $0x8] sm:$0xff]
      %v787 = vld [vmem:[#allocation13 + $0x10] sm:$0xff]
      %v788 = vld [vmem:[#allocation13 + $0x18] sm:$0xff]
      %v789 = vld [vmem:[#allocation13 + $0x20] sm:$0xff]
      %v790 = vld [vmem:[#allocation13 + $0x28] sm:$0xff]
      %v791 = vld [vmem:[#allocation13 + $0x30] sm:$0xff]
      %v792 = vld [vmem:[#allocation13 + $0x38] sm:$0xff]
      %v793 = vld [vmem:[#allocation13 + $0x40] sm:$0xff]
      %v794 = vld [vmem:[#allocation13 + $0x48] sm:$0xff]
      %v795 = vld [vmem:[#allocation13 + $0x50] sm:$0xff]
      %v796 = vld [vmem:[#allocation13 + $0x58] sm:$0xff]
      %v797 = vld [vmem:[#allocation13 + $0x60] sm:$0xff]
      %v798 = vld [vmem:[#allocation13 + $0x68] sm:$0xff]
      %v799 = vld [vmem:[#allocation13 + $0x70] sm:$0xff]
      %v800 = vld [vmem:[#allocation13 + $0x78] sm:$0xff]
      %v809 = vsel %vm310, %v732, %v726
      %v810 = vsel %vm312, %v738, %v809
      %v811 = vsel %vm314, %v744, %v810
      %v812 = vsel %vm316, %v750, %v811
      %v813 = vsel %vm318, %v756, %v812
      %v814 = vsel %vm320, %v762, %v813
      %v815 = vsel %vm322, %v768, %v814
      %817 = vmatprep.subr.mxu0 0.0
      %818 = vmatpush1.msra.mxu0 %v785
      %819 = vmatprep.subr.mxu0 0.0
      %820 = vmatpush1.msra.mxu0 %v786
      %821 = vmatprep.subr.mxu0 0.0
      %822 = vmatpush1.msra.mxu0 %v787
      %823 = vmatprep.subr.mxu0 0.0
      %824 = vmatpush1.msra.mxu0 %v788
      %825 = vmatprep.subr.mxu0 0.0
      %826 = vmatpush1.msra.mxu0 %v789
      %827 = vmatprep.subr.mxu0 0.0
      %828 = vmatpush1.msra.mxu0 %v790
      %829 = vmatprep.subr.mxu0 0.0
      %830 = vmatpush1.msra.mxu0 %v791
      %831 = vmatprep.subr.mxu0 0.0
      %832 = vmatpush1.msra.mxu0 %v792
      %833 = vmatprep.subr.mxu0 0.0
      %834 = vmatpush1.msra.mxu0 %v793
      %835 = vmatprep.subr.mxu0 0.0
      %836 = vmatpush1.msra.mxu0 %v794
      %837 = vmatprep.subr.mxu0 0.0
      %838 = vmatpush1.msra.mxu0 %v795
      %839 = vmatprep.subr.mxu0 0.0
      %840 = vmatpush1.msra.mxu0 %v796
      %841 = vmatprep.subr.mxu0 0.0
      %842 = vmatpush1.msra.mxu0 %v797
      %843 = vmatprep.subr.mxu0 0.0
      %844 = vmatpush1.msra.mxu0 %v798
      %845 = vmatprep.subr.mxu0 0.0
      %846 = vmatpush1.msra.mxu0 %v799
      %847 = vmatprep.subr.mxu0 0.0
      %848 = vmatpush1.msra.mxu0 %v800
      %849 = vmatprep.subr.mxu0 0.0
      %850 = vmatpush1.msra.mxu0 0.0
      %851 = vmatprep.subr.mxu0 0.0
      %852 = vmatpush1.msra.mxu0 0.0
      %853 = vmatprep.subr.mxu0 0.0
      %854 = vmatpush1.msra.mxu0 0.0
      %855 = vmatprep.subr.mxu0 0.0
      %856 = vmatpush1.msra.mxu0 0.0
      %857 = vmatprep.subr.mxu0 0.0
      %858 = vmatpush1.msra.mxu0 0.0
      %859 = vmatprep.subr.mxu0 0.0
      %860 = vmatpush1.msra.mxu0 0.0
      %861 = vmatprep.subr.mxu0 0.0
      %862 = vmatpush1.msra.mxu0 0.0
      %863 = vmatprep.subr.mxu0 0.0
      %864 = vmatpush1.msra.mxu0 0.0
      %865 = vmatprep.subr.mxu0 0.0
      %866 = vmatpush1.msra.mxu0 0.0
      %867 = vmatprep.subr.mxu0 0.0
      %868 = vmatpush1.msra.mxu0 0.0
      %869 = vmatprep.subr.mxu0 0.0
      %870 = vmatpush1.msra.mxu0 0.0
      %871 = vmatprep.subr.mxu0 0.0
      %872 = vmatpush1.msra.mxu0 0.0
      %873 = vmatprep.subr.mxu0 0.0
      %874 = vmatpush1.msra.mxu0 0.0
      %875 = vmatprep.subr.mxu0 0.0
      %876 = vmatpush1.msra.mxu0 0.0
      %877 = vmatprep.subr.mxu0 0.0
      %878 = vmatpush1.msra.mxu0 0.0
      %879 = vmatprep.subr.mxu0 0.0
      %880 = vmatpush1.msra.mxu0 0.0
      %881 = vmatprep.mubr.f32.mxu0 0.0
      %882 = vmatmul.mubr.f32.gmra.mrb[0].mxu0 %v815
      %v883 = vpop.f32.mrb[0].mxu0
      %v884 = vadd.f32 0.0, %v883
      %v885 = vpop.f32.mrb[0].mxu0
      %886 = vdwg.mxu0
      %887 = vmatprep.subr.mxu0 0.0
      %888 = vmatpush1.msra.mxu0 %v769
      %889 = vmatprep.subr.mxu0 0.0
      %890 = vmatpush1.msra.mxu0 %v770
      %891 = vmatprep.subr.mxu0 0.0
      %892 = vmatpush1.msra.mxu0 %v771
      %893 = vmatprep.subr.mxu0 0.0
      %894 = vmatpush1.msra.mxu0 %v772
      %895 = vmatprep.subr.mxu0 0.0
      %896 = vmatpush1.msra.mxu0 %v773
      %897 = vmatprep.subr.mxu0 0.0
      %898 = vmatpush1.msra.mxu0 %v774
      %899 = vmatprep.subr.mxu0 0.0
      %900 = vmatpush1.msra.mxu0 %v775
      %901 = vmatprep.subr.mxu0 0.0
      %902 = vmatpush1.msra.mxu0 %v776
      %903 = vmatprep.subr.mxu0 0.0
      %904 = vmatpush1.msra.mxu0 %v777
      %905 = vmatprep.subr.mxu0 0.0
      %906 = vmatpush1.msra.mxu0 %v778
      %907 = vmatprep.subr.mxu0 0.0
      %908 = vmatpush1.msra.mxu0 %v779
      %909 = vmatprep.subr.mxu0 0.0
      %910 = vmatpush1.msra.mxu0 %v780
      %911 = vmatprep.subr.mxu0 0.0
      %912 = vmatpush1.msra.mxu0 %v781
      %913 = vmatprep.subr.mxu0 0.0
      %914 = vmatpush1.msra.mxu0 %v782
      %915 = vmatprep.subr.mxu0 0.0
      %916 = vmatpush1.msra.mxu0 %v783
      %917 = vmatprep.subr.mxu0 0.0
      %918 = vmatpush1.msra.mxu0 %v784
      %919 = vmatprep.subr.mxu0 0.0
      %920 = vmatpush1.msra.mxu0 0.0
      %921 = vmatprep.subr.mxu0 0.0
      %922 = vmatpush1.msra.mxu0 0.0
      %923 = vmatprep.subr.mxu0 0.0
      %924 = vmatpush1.msra.mxu0 0.0
      %925 = vmatprep.subr.mxu0 0.0
      %926 = vmatpush1.msra.mxu0 0.0
      %927 = vmatprep.subr.mxu0 0.0
      %928 = vmatpush1.msra.mxu0 0.0
      %929 = vmatprep.subr.mxu0 0.0
      %930 = vmatpush1.msra.mxu0 0.0
      %931 = vmatprep.subr.mxu0 0.0
      %932 = vmatpush1.msra.mxu0 0.0
      %933 = vmatprep.subr.mxu0 0.0
      %934 = vmatpush1.msra.mxu0 0.0
      %935 = vmatprep.subr.mxu0 0.0
      %936 = vmatpush1.msra.mxu0 0.0
      %937 = vmatprep.subr.mxu0 0.0
      %938 = vmatpush1.msra.mxu0 0.0
      %939 = vmatprep.subr.mxu0 0.0
      %940 = vmatpush1.msra.mxu0 0.0
      %941 = vmatprep.subr.mxu0 0.0
      %942 = vmatpush1.msra.mxu0 0.0
      %943 = vmatprep.subr.mxu0 0.0
      %944 = vmatpush1.msra.mxu0 0.0
      %945 = vmatprep.subr.mxu0 0.0
      %946 = vmatpush1.msra.mxu0 0.0
      %947 = vmatprep.subr.mxu0 0.0
      %948 = vmatpush1.msra.mxu0 0.0
      %949 = vmatprep.subr.mxu0 0.0
      %950 = vmatpush1.msra.mxu0 0.0
      %951 = vmatprep.mubr.f32.mxu0 0.0
      %952 = vmatmul.mubr.f32.gmra.mrb[0].mxu0 %v117
      %v953 = vpop.f32.mrb[0].mxu0
      %v954 = vadd.f32 %v884, %v953
      %v955 = vpop.f32.mrb[0].mxu0
      %956 = vdwg.mxu0
      %v957 = vld [vmem:[%s5] sm:$0x1]
      %v959 = vlaneseq
      %v960 = vshrl.u32 %v959, 7
      %v961 = vsub.s32 0, %v960
      %v962 = vrot.slane %v957, %v961
      %v964 = vadd.f32 %v954, %v962
      %v965 = vtanh.pop %v964
      %966 = vst [vmem:[#allocation17] sm:$0xff] %v965
      %v967 = vpack.c.bf16 %v965, %v965
      %968 = vst [vmem:[#allocation2] sm:$0xf] %v967
      %vm969 = vcmask 7168
      %970 = vst.msk [vmem:[#allocation3] sm:$0xff] %vm969, -inf
      %971 = vst.msk [vmem:[#allocation4] sm:$0xff] %vm969, 0.0
    $region61: #{tpu_custom_call.1} parent=1 // pred_fallthru
      _
    %v972 = vld [vmem:[#allocation2] sm:$0xf]
    %v973 = vld [vmem:[#allocation14] sm:$0xf]
    %v974 = vld [vmem:[#allocation14 + $0x4] sm:$0xf]
    %v975 = vld [vmem:[#allocation14 + $0x8] sm:$0xf]
    %v976 = vld [vmem:[#allocation14 + $0xc] sm:$0xf]
    %v977 = vld [vmem:[#allocation14 + $0x10] sm:$0xf]
    %v978 = vld [vmem:[#allocation14 + $0x14] sm:$0xf]
    %v979 = vld [vmem:[#allocation14 + $0x18] sm:$0xf]
    %v980 = vld [vmem:[#allocation14 + $0x1c] sm:$0xf]
    %v981 = vld [vmem:[#allocation14 + $0x20] sm:$0xf]
    %v982 = vld [vmem:[#allocation14 + $0x24] sm:$0xf]
    %v983 = vld [vmem:[#allocation14 + $0x28] sm:$0xf]
    %v984 = vld [vmem:[#allocation14 + $0x2c] sm:$0xf]
    %v985 = vld [vmem:[#allocation14 + $0x30] sm:$0xf]
    %v986 = vld [vmem:[#allocation14 + $0x34] sm:$0xf]
    %v987 = vld [vmem:[#allocation14 + $0x38] sm:$0xf]
    %v988 = vld [vmem:[#allocation14 + $0x3c] sm:$0xf]
    %v989 = vld [vmem:[%s7] sm:$0x1]
    %v991 = vlaneseq
    %v992 = vshrl.u32 %v991, 7
    %v993 = vsub.s32 0, %v992
    %v994 = vrot.slane %v989, %v993
    %v1012 = vunpack.c.l.b16 %v973
    %v1013 = vunpack.c.l.b16 %v974
    %v1014 = vunpack.c.l.b16 %v975
    %v1015 = vunpack.c.l.b16 %v976
    %v1016 = vunpack.c.l.b16 %v977
    %v1017 = vunpack.c.l.b16 %v978
    %v1018 = vunpack.c.l.b16 %v979
    %v1019 = vunpack.c.l.b16 %v980
    %v1020 = vunpack.c.l.b16 %v981
    %v1021 = vunpack.c.l.b16 %v982
    %v1022 = vunpack.c.l.b16 %v983
    %v1023 = vunpack.c.l.b16 %v984
    %v1024 = vunpack.c.l.b16 %v985
    %v1025 = vunpack.c.l.b16 %v986
    %v1026 = vunpack.c.l.b16 %v987
    %v1027 = vunpack.c.l.b16 %v988
    %v1028 = vpack.c.b16 %v1013, %v1012
    %v1029 = vpack.c.b16 %v1015, %v1014
    %v1030 = vpack.c.b16 %v1017, %v1016
    %v1031 = vpack.c.b16 %v1019, %v1018
    %v1032 = vpack.c.b16 %v1021, %v1020
    %v1033 = vpack.c.b16 %v1023, %v1022
    %v1034 = vpack.c.b16 %v1025, %v1024
    %v1035 = vpack.c.b16 %v1027, %v1026
    %1044 = vmatprep.subr.bf16.mxu0 0
    %1045 = vmatpush1.bf16.msra.mxu0 %v1028
    %1046 = vmatprep.subr.bf16.mxu0 0
    %1047 = vmatpush1.bf16.msra.mxu0 %v1029
    %1048 = vmatprep.subr.bf16.mxu0 0
    %1049 = vmatpush1.bf16.msra.mxu0 %v1030
    %1050 = vmatprep.subr.bf16.mxu0 0
    %1051 = vmatpush1.bf16.msra.mxu0 %v1031
    %1052 = vmatprep.subr.bf16.mxu0 0
    %1053 = vmatpush1.bf16.msra.mxu0 %v1032
    %1054 = vmatprep.subr.bf16.mxu0 0
    %1055 = vmatpush1.bf16.msra.mxu0 %v1033
    %1056 = vmatprep.subr.bf16.mxu0 0
    %1057 = vmatpush1.bf16.msra.mxu0 %v1034
    %1058 = vmatprep.subr.bf16.mxu0 0
    %1059 = vmatpush1.bf16.msra.mxu0 %v1035
    %1060 = vmatprep.subr.bf16.mxu0 0
    %1061 = vmatpush1.bf16.msra.mxu0 0
    %1062 = vmatprep.subr.bf16.mxu0 0
    %1063 = vmatpush1.bf16.msra.mxu0 0
    %1064 = vmatprep.subr.bf16.mxu0 0
    %1065 = vmatpush1.bf16.msra.mxu0 0
    %1066 = vmatprep.subr.bf16.mxu0 0
    %1067 = vmatpush1.bf16.msra.mxu0 0
    %1068 = vmatprep.subr.bf16.mxu0 0
    %1069 = vmatpush1.bf16.msra.mxu0 0
    %1070 = vmatprep.subr.bf16.mxu0 0
    %1071 = vmatpush1.bf16.msra.mxu0 0
    %1072 = vmatprep.subr.bf16.mxu0 0
    %1073 = vmatpush1.bf16.msra.mxu0 0
    %1074 = vmatprep.subr.bf16.mxu0 0
    %1075 = vmatpush1.bf16.msra.mxu0 0
    %1076 = vmatprep.mubr.bf16.mxu0 0
    %1077 = vmatmul.mubr.bf16.gmra.mrb[0].mxu0 %v972
    %v1078 = vpop.f32.mrb[0].mxu0
    %v1079 = vadd.f32 %v994, %v1078
    %v1080 = vpop.f32.mrb[0].mxu0
    %v1081 = vpop.f32.mrb[0].mxu0
    %v1082 = vpop.f32.mrb[0].mxu0
    %1083 = vdwg.mxu0
    %1084 = vst [vmem:[#allocation16] sm:$0xff] %v1079
    %v1085 = vld [vmem:[#allocation3] sm:$0xff]
    %1086 = vmax.xlane.f32.xlu0 %v1079
    %v1087 = vpop.xlane.xlu0 %1086
    %v1088 = vmax.f32 %v1085, %v1087
    %v1089 = vld [vmem:[#allocation4] sm:$0xff]
    %v1090 = vsub.f32 %v1085, %v1088
    %v1091 = vmul.f32 %v1090, 1.442695
    %v1092 = vpow.pop %v1091
    %v1093 = vmul.f32 %v1089, %v1092
    %1095 = vset.pattern.permute.xlu0 0
    %1096 = vperm.xlu0 %1095, %v1088
    %v1097 = vpop.permute.xlu0 %1096
    %v1099 = vsub.f32 %v1079, %v1097
    %v1100 = vmul.f32 %v1099, 1.442695
    %v1101 = vpow.pop %v1100
    %1102 = vadd.xlane.f32.xlu0 %v1101
    %v1103 = vpop.xlane.xlu0 %1102
    %v1104 = vadd.f32 %v1093, %v1103
    %vm1105 = vcmask 7168
    %1106 = vst.msk [vmem:[#allocation4] sm:$0xff] %vm1105, %v1104
    %1107 = vst.msk [vmem:[#allocation3] sm:$0xff] %vm1105, %v1088
    // Predicated region
    $region62: #{tpu_custom_call.1} parent=1 // pred_check
      %p1108 = pneg %p113
    $region63: #{tpu_custom_call.1} parent=1 // pred_check_branch
      %1110 = sbr.rel (%p1108) target = $region65
    $region64: #{tpu_custom_call.1} parent=1 // pred_region
      %v1111 = vld [vmem:[#allocation3] sm:$0xff]
      %v1112 = vld [vmem:[#allocation4] sm:$0xff]
      %v1113 = vlog2.pop %v1112
      %v1114 = vmul.f32 %v1113, 0.6931472
      %v1115 = vadd.f32 %v1111, %v1114
      %1116 = vst.msk [vmem:[%s9] sm:$0xff] %vm1105, %v1115
    $region65: #{tpu_custom_call.1} parent=1 // pred_fallthru
      _
    // Predicated region
    $region66: #{tpu_custom_call.1} parent=1 // pred_check
      _
    $region67: #{tpu_custom_call.1} parent=1 // pred_check_branch
      %1118 = sbr.rel (0) target = $region69
    $region68: #{tpu_custom_call.1} parent=1 // pred_region
      %s1120 = ssub.s32 128, 128
      %1121 = vsyncadd [#allocation7], %s1120
      %s1123 = sshll.u32 [#allocation16], 4
      %s1124 = int_to_ptr.vmem [resolvable:$true] %s1123
      %1126 = dma.vmem_to_hbm [thread:$0]  %s1124, 128, %s8, [#allocation7]
    $region69: #{tpu_custom_call.1} parent=1 // pred_fallthru
      _
    // Predicated region
    $region70: #{tpu_custom_call.1} parent=1 // pred_check
      _
    $region71: #{tpu_custom_call.1} parent=1 // pred_check_branch
      %1128 = sbr.rel (0) target = $region73
    $region72: #{tpu_custom_call.1} parent=1 // pred_region
      _
    $region73: #{tpu_custom_call.1} parent=1 // pred_fallthru
      _
    // Predicated region
    $region74: #{tpu_custom_call.1} parent=1 // pred_check
      _
    $region75: #{tpu_custom_call.1} parent=1 // pred_check_branch
      %1130 = sbr.rel (0) target = $region77
    $region76: #{tpu_custom_call.1} parent=1 // pred_region
      %s1132 = ssub.s32 128, 128
      %1133 = vsyncadd [#allocation18], %s1132
      %s1135 = sshll.u32 [#allocation17], 4
      %s1136 = int_to_ptr.vmem [resolvable:$true] %s1135
      %1138 = dma.vmem_to_hbm [thread:$0]  %s1136, 128, %s10, [#allocation18]
    $region77: #{tpu_custom_call.1} parent=1 // pred_fallthru
      _
    // Predicated region
    $region78: #{tpu_custom_call.1} parent=1 // pred_check
      _
    $region79: #{tpu_custom_call.1} parent=1 // pred_check_branch
      %1140 = sbr.rel (0) target = $region81
    $region80: #{tpu_custom_call.1} parent=1 // pred_region
      %1141 = dma.done [#allocation7], 128
    $region81: #{tpu_custom_call.1} parent=1 // pred_fallthru
      _
    // Predicated region
    $region82: #{tpu_custom_call.1} parent=1 // pred_check
      _
    $region83: #{tpu_custom_call.1} parent=1 // pred_check_branch
      %1143 = sbr.rel (0) target = $region85
    $region84: #{tpu_custom_call.1} parent=1 // pred_region
      _
    $region85: #{tpu_custom_call.1} parent=1 // pred_fallthru
      _
    // Predicated region
    $region86: #{tpu_custom_call.1} parent=1 // pred_check
      _
    $region87: #{tpu_custom_call.1} parent=1 // pred_check_branch
      %1145 = sbr.rel (0) target = $region89
    $region88: #{tpu_custom_call.1} parent=1 // pred_region
      %1146 = dma.done [#allocation18], 128
    $region89: #{tpu_custom_call.1} parent=1 // pred_fallthru
      _
    %1147 = vsyncpa [#allocation6], 1
    %1148 = vsyncpa [#allocation9], 1
    %1149 = vsyncpa [#allocation12], 1
    %1150 = vsyncpa [#allocation15], 1
    %1151 = vsyncpa [#allocation7], 1
    %1152 = vsyncpa [#allocation18], 1

</llo_original>
